<compile_context>
chip_gen: v6e
topology: v6e:2x2x1
jax: 0.10.0
libtpu: 0.0.40
codegen_flags: <defaults>
</compile_context>

<pallas_src>
import functools

import jax
import jax.numpy as jnp
from jax.experimental import pallas as pl
from jax.experimental.pallas import tpu as pltpu

LANE_PAD = 128  # lane width: keep every feature axis a multiple of 128


# ----------------------------------------------------------------------------
# Fused kernel: conv1 -> relu -> conv2 -> relu -> conv3 -> mean-pool ->
#               linear -> softmax -> threshold, all in one pallas_call.
# ----------------------------------------------------------------------------
def _gcn_fused_kernel(a_ref, x_ref, p_ref,
                      w1_ref, b1_ref, w2_ref, b2_ref, w3_ref, b3_ref,
                      wdc_ref, bdc_ref, o_ref, *, out_dim):
    a = a_ref[...]                                                   # [N, N]

    # ---- layer 1: (A @ X) @ W1 + b1, ReLU  (contract over small F first) ----
    ax = jnp.dot(a, x_ref[...], preferred_element_type=jnp.float32)  # [N, F]
    h = jnp.dot(ax, w1_ref[...], preferred_element_type=jnp.float32) + b1_ref[...]
    h = jnp.maximum(h, 0.0)                                          # [N, 128]

    # ---- layer 2: A @ (h @ W2) + b2, ReLU ----
    hw = jnp.dot(h, w2_ref[...], preferred_element_type=jnp.float32)
    h = jnp.dot(a, hw, preferred_element_type=jnp.float32) + b2_ref[...]
    h = jnp.maximum(h, 0.0)

    # ---- layer 3: A @ (h @ W3) + b3 (no ReLU) ----
    hw = jnp.dot(h, w3_ref[...], preferred_element_type=jnp.float32)
    h = jnp.dot(a, hw, preferred_element_type=jnp.float32) + b3_ref[...]

    # ---- global mean pool as matmul: pooled = P @ h ----
    pooled = jnp.dot(p_ref[...], h, preferred_element_type=jnp.float32)  # [G, 128]

    # TODO(synk): F.dropout(p=0.5, training=self.training) — treated as eval mode (identity).

    # ---- decoder head: softmax(pooled @ W_dc + b_dc) >= 0.5 ----
    logits = jnp.dot(pooled, wdc_ref[...],
                     preferred_element_type=jnp.float32) + bdc_ref[...]   # [G, 128]
    col = jax.lax.broadcasted_iota(jnp.int32, logits.shape, 1)
    logits = jnp.where(col < out_dim, logits, jnp.float32(-1e30))         # mask lane padding
    m = jnp.max(logits, axis=-1, keepdims=True)
    e = jnp.exp(logits - m)
    inv = pl.reciprocal(jnp.sum(e, axis=-1, keepdims=True), approx=True)  # EUP, off VALU path
    probs = e * inv
    o_ref[...] = (probs >= jnp.float32(0.5)).astype(o_ref.dtype)


def gcn_fused(a_hat, x, pool_mat, params, out_dim):
    """Single fused pallas_call for the whole forward pass. Returns [G, out_dim]."""
    g = pool_mat.shape[0]

    def pad2(arr, rows, cols):
        out = jnp.zeros((rows, cols), jnp.float32)
        return out.at[: arr.shape[0], : arr.shape[1]].set(arr)

    hp = LANE_PAD
    # Lane-pad the parameters (zero padding keeps the math exact; padded logit
    # columns are masked in-kernel before the softmax).
    w1p = pad2(params["w1"], params["w1"].shape[0], hp)   # [F, 128]
    b1p = pad2(params["b1"], 1, hp)
    w2p = pad2(params["w2"], hp, hp)                      # [128, 128]
    b2p = pad2(params["b2"], 1, hp)
    w3p = pad2(params["w3"], hp, hp)
    b3p = pad2(params["b3"], 1, hp)
    wdcp = pad2(params["w_dc"], hp, hp)
    bdcp = pad2(params["b_dc"], 1, hp)

    args = (a_hat, x, pool_mat, w1p, b1p, w2p, b2p, w3p, b3p, wdcp, bdcp)

    kernel = functools.partial(_gcn_fused_kernel, out_dim=out_dim)
    out_pad = pl.pallas_call(
        kernel,
        out_shape=jax.ShapeDtypeStruct((g, hp), jnp.float32),
        grid=(1,),
        in_specs=[pl.BlockSpec(a.shape, lambda i: (0, 0)) for a in args],
        out_specs=pl.BlockSpec((g, hp), lambda i: (0, 0)),
        compiler_params=pltpu.CompilerParams(dimension_semantics=("arbitrary",)),
    )(*args)
    return out_pad[:, :out_dim]


# ----------------------------------------------------------------------------
# Glue (dense graph preprocessing + parameter init) in plain JAX
# ----------------------------------------------------------------------------
def normalized_adjacency(edge_index, num_nodes):
    """A_hat = D^{-1/2} (A + I) D^{-1/2} as a dense [N, N] float32 matrix."""
    src, dst = edge_index[0], edge_index[1]
    adj = jnp.zeros((num_nodes, num_nodes), jnp.float32)
    adj = adj.at[src, dst].set(1.0)
    idx = jnp.arange(num_nodes)
    adj = adj.at[idx, idx].set(1.0)      # self loops (no doubling if already present)
    deg = jnp.sum(adj, axis=1)
    dinv = jnp.where(deg > 0, 1.0 / jnp.sqrt(deg), 0.0)
    return dinv[:, None] * adj * dinv[None, :]


def mean_pool_matrix(batch, num_graphs):
    """P[g, i] = 1/|graph g| if batch[i] == g else 0  ->  P @ X == global_mean_pool."""
    onehot = (batch[None, :] == jnp.arange(num_graphs)[:, None]).astype(jnp.float32)
    counts = jnp.maximum(jnp.sum(onehot, axis=1, keepdims=True), 1.0)
    return onehot / counts


def init_params(key, num_node_features, hidden_channels, bioprint_size):
    ks = jax.random.split(key, 8)

    def lin(k, fan_in, fan_out):
        scale = 1.0 / jnp.sqrt(jnp.float32(fan_in))
        return jax.random.uniform(k, (fan_in, fan_out), jnp.float32, -scale, scale)

    return {
        "w1": lin(ks[0], num_node_features, hidden_channels),
        "b1": jnp.zeros((1, hidden_channels), jnp.float32),
        "w2": lin(ks[1], hidden_channels, hidden_channels),
        "b2": jnp.zeros((1, hidden_channels), jnp.float32),
        "w3": lin(ks[2], hidden_channels, hidden_channels),
        "b3": jnp.zeros((1, hidden_channels), jnp.float32),
        "w_dc": lin(ks[3], hidden_channels, bioprint_size),
        "b_dc": jax.random.uniform(
            ks[4], (1, bioprint_size), jnp.float32,
            -1.0 / jnp.sqrt(jnp.float32(hidden_channels)),
            1.0 / jnp.sqrt(jnp.float32(hidden_channels))),
    }


def gcn_forward(params, x, edge_index, batch, num_graphs, bioprint_size):
    n = x.shape[0]
    a_hat = normalized_adjacency(edge_index, n)
    p = mean_pool_matrix(batch, num_graphs)
    return gcn_fused(a_hat, x, p, params, bioprint_size)


# ----------------------------------------------------------------------------
# Main
# ----------------------------------------------------------------------------
if __name__ == "__main__":
    NUM_NODE_FEATURES = 4
    HIDDEN_CHANNELS = 32
    BIOPRINT_SIZE = 8
    NUM_NODES = 16       # 2 graphs x 8 nodes
    NUM_GRAPHS = 2

    key = jax.random.PRNGKey(0)
    k_x, k_p = jax.random.split(key)

    # node features [N, F]
    x = jax.random.normal(k_x, (NUM_NODES, NUM_NODE_FEATURES), jnp.float32)

    # edge_index [2, E]: chain within each graph, symmetric
    src, dst = [], []
    for g in range(NUM_GRAPHS):
        base = g * 8
        for i in range(7):
            src += [base + i, base + i + 1]
            dst += [base + i + 1, base + i]
    edge_index = jnp.array([src, dst], dtype=jnp.int32)

    # batch assignment [N]
    batch = jnp.array([0] * 8 + [1] * 8, dtype=jnp.int32)

    params = init_params(k_p, NUM_NODE_FEATURES, HIDDEN_CHANNELS, BIOPRINT_SIZE)

    out = gcn_forward(params, x, edge_index, batch, NUM_GRAPHS, BIOPRINT_SIZE)
    out = jax.block_until_ready(out)
    assert out.shape == (NUM_GRAPHS, BIOPRINT_SIZE)
    assert out.dtype == jnp.float32
    print("KERNEL_OK")
</pallas_src>

<mosaic_0001>
module attributes {stable_mosaic.version = 11 : i64} {
  func.func @_gcn_fused_kernel(%arg0: i32, %arg1: memref<16x16xf32, #tpu.memory_space<vmem>>, %arg2: memref<16x4xf32, #tpu.memory_space<vmem>>, %arg3: memref<2x16xf32, #tpu.memory_space<vmem>>, %arg4: memref<4x128xf32, #tpu.memory_space<vmem>>, %arg5: memref<1x128xf32, #tpu.memory_space<vmem>>, %arg6: memref<128x128xf32, #tpu.memory_space<vmem>>, %arg7: memref<1x128xf32, #tpu.memory_space<vmem>>, %arg8: memref<128x128xf32, #tpu.memory_space<vmem>>, %arg9: memref<1x128xf32, #tpu.memory_space<vmem>>, %arg10: memref<128x128xf32, #tpu.memory_space<vmem>>, %arg11: memref<1x128xf32, #tpu.memory_space<vmem>>, %arg12: memref<2x128xf32, #tpu.memory_space<vmem>>) attributes {dimension_semantics = [#tpu.dimension_semantics<arbitrary>], iteration_bounds = array<i64: 1>, scalar_prefetch = 0 : i64, scratch_operands = 0 : i64, tpu.core_type = #tpu.core_type<tc>, window_params = [{pipeline_mode = #tpu.pipeline_mode<synchronous>, transform_indices = @transform_0, window_bounds = array<i64: 16, 16>}, {pipeline_mode = #tpu.pipeline_mode<synchronous>, transform_indices = @transform_1, window_bounds = array<i64: 16, 4>}, {pipeline_mode = #tpu.pipeline_mode<synchronous>, transform_indices = @transform_2, window_bounds = array<i64: 2, 16>}, {pipeline_mode = #tpu.pipeline_mode<synchronous>, transform_indices = @transform_3, window_bounds = array<i64: 4, 128>}, {pipeline_mode = #tpu.pipeline_mode<synchronous>, transform_indices = @transform_4, window_bounds = array<i64: 1, 128>}, {pipeline_mode = #tpu.pipeline_mode<synchronous>, transform_indices = @transform_5, window_bounds = array<i64: 128, 128>}, {pipeline_mode = #tpu.pipeline_mode<synchronous>, transform_indices = @transform_6, window_bounds = array<i64: 1, 128>}, {pipeline_mode = #tpu.pipeline_mode<synchronous>, transform_indices = @transform_7, window_bounds = array<i64: 128, 128>}, {pipeline_mode = #tpu.pipeline_mode<synchronous>, transform_indices = @transform_8, window_bounds = array<i64: 1, 128>}, {pipeline_mode = #tpu.pipeline_mode<synchronous>, transform_indices = @transform_9, window_bounds = array<i64: 128, 128>}, {pipeline_mode = #tpu.pipeline_mode<synchronous>, transform_indices = @transform_10, window_bounds = array<i64: 1, 128>}, {pipeline_mode = #tpu.pipeline_mode<synchronous>, transform_indices = @transform_11, window_bounds = array<i64: 2, 128>}]} {
    %c0 = arith.constant 0 : index
    %c0_0 = arith.constant 0 : index
    %0 = vector.load %arg1[%c0, %c0_0] : memref<16x16xf32, #tpu.memory_space<vmem>>, vector<16x16xf32>
    %c0_1 = arith.constant 0 : index
    %c0_2 = arith.constant 0 : index
    %1 = vector.load %arg2[%c0_1, %c0_2] : memref<16x4xf32, #tpu.memory_space<vmem>>, vector<16x4xf32>
    %cst = arith.constant dense<0.000000e+00> : vector<16x4xf32>
    %2 = tpu.matmul %0, %1, %cst {dimension_numbers = #tpu.dot_dimension_numbers<[1], [0], [0], [1], [0, 0, 1, 1], [], []>} : vector<16x16xf32>, vector<16x4xf32>, vector<16x4xf32> -> vector<16x4xf32>
    %c0_3 = arith.constant 0 : index
    %c0_4 = arith.constant 0 : index
    %3 = vector.load %arg4[%c0_3, %c0_4] : memref<4x128xf32, #tpu.memory_space<vmem>>, vector<4x128xf32>
    %cst_5 = arith.constant dense<0.000000e+00> : vector<16x128xf32>
    %4 = tpu.matmul %2, %3, %cst_5 {dimension_numbers = #tpu.dot_dimension_numbers<[1], [0], [0], [1], [0, 0, 1, 1], [], []>} : vector<16x4xf32>, vector<4x128xf32>, vector<16x128xf32> -> vector<16x128xf32>
    %c0_6 = arith.constant 0 : index
    %c0_7 = arith.constant 0 : index
    %5 = vector.load %arg5[%c0_6, %c0_7] : memref<1x128xf32, #tpu.memory_space<vmem>>, vector<1x128xf32>
    %6 = vector.broadcast %5 : vector<1x128xf32> to vector<16x128xf32>
    %7 = arith.addf %4, %6 : vector<16x128xf32>
    %cst_8 = arith.constant 0.000000e+00 : f32
    %8 = vector.broadcast %cst_8 : f32 to vector<16x128xf32>
    %9 = arith.maximumf %7, %8 : vector<16x128xf32>
    %c0_9 = arith.constant 0 : index
    %c0_10 = arith.constant 0 : index
    %10 = vector.load %arg6[%c0_9, %c0_10] : memref<128x128xf32, #tpu.memory_space<vmem>>, vector<128x128xf32>
    %cst_11 = arith.constant dense<0.000000e+00> : vector<16x128xf32>
    %11 = tpu.matmul %9, %10, %cst_11 {dimension_numbers = #tpu.dot_dimension_numbers<[1], [0], [0], [1], [0, 0, 1, 1], [], []>} : vector<16x128xf32>, vector<128x128xf32>, vector<16x128xf32> -> vector<16x128xf32>
    %cst_12 = arith.constant dense<0.000000e+00> : vector<16x128xf32>
    %12 = tpu.matmul %0, %11, %cst_12 {dimension_numbers = #tpu.dot_dimension_numbers<[1], [0], [0], [1], [0, 0, 1, 1], [], []>} : vector<16x16xf32>, vector<16x128xf32>, vector<16x128xf32> -> vector<16x128xf32>
    %c0_13 = arith.constant 0 : index
    %c0_14 = arith.constant 0 : index
    %13 = vector.load %arg7[%c0_13, %c0_14] : memref<1x128xf32, #tpu.memory_space<vmem>>, vector<1x128xf32>
    %14 = vector.broadcast %13 : vector<1x128xf32> to vector<16x128xf32>
    %15 = arith.addf %12, %14 : vector<16x128xf32>
    %cst_15 = arith.constant 0.000000e+00 : f32
    %16 = vector.broadcast %cst_15 : f32 to vector<16x128xf32>
    %17 = arith.maximumf %15, %16 : vector<16x128xf32>
    %c0_16 = arith.constant 0 : index
    %c0_17 = arith.constant 0 : index
    %18 = vector.load %arg8[%c0_16, %c0_17] : memref<128x128xf32, #tpu.memory_space<vmem>>, vector<128x128xf32>
    %cst_18 = arith.constant dense<0.000000e+00> : vector<16x128xf32>
    %19 = tpu.matmul %17, %18, %cst_18 {dimension_numbers = #tpu.dot_dimension_numbers<[1], [0], [0], [1], [0, 0, 1, 1], [], []>} : vector<16x128xf32>, vector<128x128xf32>, vector<16x128xf32> -> vector<16x128xf32>
    %cst_19 = arith.constant dense<0.000000e+00> : vector<16x128xf32>
    %20 = tpu.matmul %0, %19, %cst_19 {dimension_numbers = #tpu.dot_dimension_numbers<[1], [0], [0], [1], [0, 0, 1, 1], [], []>} : vector<16x16xf32>, vector<16x128xf32>, vector<16x128xf32> -> vector<16x128xf32>
    %c0_20 = arith.constant 0 : index
    %c0_21 = arith.constant 0 : index
    %21 = vector.load %arg9[%c0_20, %c0_21] : memref<1x128xf32, #tpu.memory_space<vmem>>, vector<1x128xf32>
    %22 = vector.broadcast %21 : vector<1x128xf32> to vector<16x128xf32>
    %23 = arith.addf %20, %22 : vector<16x128xf32>
    %c0_22 = arith.constant 0 : index
    %c0_23 = arith.constant 0 : index
    %24 = vector.load %arg3[%c0_22, %c0_23] : memref<2x16xf32, #tpu.memory_space<vmem>>, vector<2x16xf32>
    %cst_24 = arith.constant dense<0.000000e+00> : vector<2x128xf32>
    %25 = tpu.matmul %24, %23, %cst_24 {dimension_numbers = #tpu.dot_dimension_numbers<[1], [0], [0], [1], [0, 0, 1, 1], [], []>} : vector<2x16xf32>, vector<16x128xf32>, vector<2x128xf32> -> vector<2x128xf32>
    %c0_25 = arith.constant 0 : index
    %c0_26 = arith.constant 0 : index
    %26 = vector.load %arg10[%c0_25, %c0_26] : memref<128x128xf32, #tpu.memory_space<vmem>>, vector<128x128xf32>
    %cst_27 = arith.constant dense<0.000000e+00> : vector<2x128xf32>
    %27 = tpu.matmul %25, %26, %cst_27 {dimension_numbers = #tpu.dot_dimension_numbers<[1], [0], [0], [1], [0, 0, 1, 1], [], []>} : vector<2x128xf32>, vector<128x128xf32>, vector<2x128xf32> -> vector<2x128xf32>
    %c0_28 = arith.constant 0 : index
    %c0_29 = arith.constant 0 : index
    %28 = vector.load %arg11[%c0_28, %c0_29] : memref<1x128xf32, #tpu.memory_space<vmem>>, vector<1x128xf32>
    %29 = vector.broadcast %28 : vector<1x128xf32> to vector<2x128xf32>
    %30 = arith.addf %27, %29 : vector<2x128xf32>
    %31 = tpu.iota {dimensions = array<i32: 1>} : vector<2x128xi32>
    %c8_i32 = arith.constant 8 : i32
    %32 = vector.broadcast %c8_i32 : i32 to vector<2x128xi32>
    %33 = arith.cmpi slt, %31, %32 : vector<2x128xi32>
    %cst_30 = arith.constant -1.000000e+30 : f32
    %34 = vector.broadcast %cst_30 : f32 to vector<2x128xf32>
    %35 = arith.select %33, %30, %34 : vector<2x128xi1>, vector<2x128xf32>
    %cst_31 = arith.constant dense<0xFF800000> : vector<2xf32>
    %36 = vector.multi_reduction <maximumf>, %35, %cst_31 [1] : vector<2x128xf32> to vector<2xf32>
    %37 = vector.shape_cast %36 : vector<2xf32> to vector<2x1xf32>
    %38 = vector.broadcast %37 : vector<2x1xf32> to vector<2x128xf32>
    %39 = arith.subf %35, %38 : vector<2x128xf32>
    %40 = math.exp %39 : vector<2x128xf32>
    %cst_32 = arith.constant dense<0.000000e+00> : vector<2xf32>
    %41 = vector.multi_reduction <add>, %40, %cst_32 [1] : vector<2x128xf32> to vector<2xf32>
    %42 = vector.shape_cast %41 : vector<2xf32> to vector<2x1xf32>
    %43 = tpu.reciprocal %42 {approx = true} : vector<2x1xf32> -> vector<2x1xf32>
    %44 = vector.broadcast %43 : vector<2x1xf32> to vector<2x128xf32>
    %45 = arith.mulf %40, %44 : vector<2x128xf32>
    %cst_33 = arith.constant 5.000000e-01 : f32
    %46 = vector.broadcast %cst_33 : f32 to vector<2x128xf32>
    %47 = arith.cmpf oge, %45, %46 : vector<2x128xf32>
    %48 = arith.extui %47 : vector<2x128xi1> to vector<2x128xi32>
    %49 = arith.sitofp %48 : vector<2x128xi32> to vector<2x128xf32>
    %c0_34 = arith.constant 0 : index
    %c0_35 = arith.constant 0 : index
    %50 = vector.load %arg12[%c0_34, %c0_35] : memref<2x128xf32, #tpu.memory_space<vmem>>, vector<2x128xf32>
    tpu.vector_store %arg12[%c0_34, %c0_35], %49 {strides = array<i32>} : memref<2x128xf32, #tpu.memory_space<vmem>>, vector<2x128xf32>,
    return
  }
  func.func @transform_0(%arg0: i32) -> (i32, i32) {
    %c0_i32 = arith.constant 0 : i32
    %c0_i32_0 = arith.constant 0 : i32
    %c0_i32_1 = arith.constant 0 : i32
    return %c0_i32, %c0_i32_0 : i32, i32
  }
  func.func @transform_1(%arg0: i32) -> (i32, i32) {
    %c0_i32 = arith.constant 0 : i32
    %c0_i32_0 = arith.constant 0 : i32
    %c0_i32_1 = arith.constant 0 : i32
    return %c0_i32, %c0_i32_0 : i32, i32
  }
  func.func @transform_2(%arg0: i32) -> (i32, i32) {
    %c0_i32 = arith.constant 0 : i32
    %c0_i32_0 = arith.constant 0 : i32
    %c0_i32_1 = arith.constant 0 : i32
    return %c0_i32, %c0_i32_0 : i32, i32
  }
  func.func @transform_3(%arg0: i32) -> (i32, i32) {
    %c0_i32 = arith.constant 0 : i32
    %c0_i32_0 = arith.constant 0 : i32
    %c0_i32_1 = arith.constant 0 : i32
    return %c0_i32, %c0_i32_0 : i32, i32
  }
  func.func @transform_4(%arg0: i32) -> (i32, i32) {
    %c0_i32 = arith.constant 0 : i32
    %c0_i32_0 = arith.constant 0 : i32
    %c0_i32_1 = arith.constant 0 : i32
    return %c0_i32, %c0_i32_0 : i32, i32
  }
  func.func @transform_5(%arg0: i32) -> (i32, i32) {
    %c0_i32 = arith.constant 0 : i32
    %c0_i32_0 = arith.constant 0 : i32
    %c0_i32_1 = arith.constant 0 : i32
    return %c0_i32, %c0_i32_0 : i32, i32
  }
  func.func @transform_6(%arg0: i32) -> (i32, i32) {
    %c0_i32 = arith.constant 0 : i32
    %c0_i32_0 = arith.constant 0 : i32
    %c0_i32_1 = arith.constant 0 : i32
    return %c0_i32, %c0_i32_0 : i32, i32
  }
  func.func @transform_7(%arg0: i32) -> (i32, i32) {
    %c0_i32 = arith.constant 0 : i32
    %c0_i32_0 = arith.constant 0 : i32
    %c0_i32_1 = arith.constant 0 : i32
    return %c0_i32, %c0_i32_0 : i32, i32
  }
  func.func @transform_8(%arg0: i32) -> (i32, i32) {
    %c0_i32 = arith.constant 0 : i32
    %c0_i32_0 = arith.constant 0 : i32
    %c0_i32_1 = arith.constant 0 : i32
    return %c0_i32, %c0_i32_0 : i32, i32
  }
  func.func @transform_9(%arg0: i32) -> (i32, i32) {
    %c0_i32 = arith.constant 0 : i32
    %c0_i32_0 = arith.constant 0 : i32
    %c0_i32_1 = arith.constant 0 : i32
    return %c0_i32, %c0_i32_0 : i32, i32
  }
  func.func @transform_10(%arg0: i32) -> (i32, i32) {
    %c0_i32 = arith.constant 0 : i32
    %c0_i32_0 = arith.constant 0 : i32
    %c0_i32_1 = arith.constant 0 : i32
    return %c0_i32, %c0_i32_0 : i32, i32
  }
  func.func @transform_11(%arg0: i32) -> (i32, i32) {
    %c0_i32 = arith.constant 0 : i32
    %c0_i32_0 = arith.constant 0 : i32
    %c0_i32_1 = arith.constant 0 : i32
    return %c0_i32, %c0_i32_0 : i32, i32
  }
}

</mosaic_0001>

<llo_original>
// kernel: tpu_custom_call.1
$region0: #{tpu_custom_call.1}
  #allocation0 [shape = 'u32[]', space=smem, size = 0x4, offset = 0x4, fixed_abs, tag = 'smem constant byte address 0x4 - core index']
  #allocation1 [shape = 'u32[144,128]{1,0:T(1,128)}', space=vmem, size = 0x12000, scoped, tag = 'internal scratch']
  %s0 = inlined_call_operand.vmem [shape: f32[16,16], index: 0, kind: input, shape index: {}]
  %s1 = inlined_call_operand.vmem [shape: f32[16,4], index: 1, kind: input, shape index: {}]
  %s2 = inlined_call_operand.vmem [shape: f32[2,16], index: 2, kind: input, shape index: {}]
  %s3 = inlined_call_operand.vmem [shape: f32[4,128], index: 3, kind: input, shape index: {}]
  %s4 = inlined_call_operand.vmem [shape: f32[1,128], index: 4, kind: input, shape index: {}]
  %s5 = inlined_call_operand.hbm [shape: f32[128,128], index: 5, kind: input, shape index: {}]
  %s6 = inlined_call_operand.vmem [shape: f32[1,128], index: 6, kind: input, shape index: {}]
  %s7 = inlined_call_operand.hbm [shape: f32[128,128], index: 7, kind: input, shape index: {}]
  %s8 = inlined_call_operand.vmem [shape: f32[1,128], index: 8, kind: input, shape index: {}]
  %s9 = inlined_call_operand.hbm [shape: f32[128,128], index: 9, kind: input, shape index: {}]
  %s10 = inlined_call_operand.vmem [shape: f32[1,128], index: 10, kind: input, shape index: {}]
  %s11 = inlined_call_operand.hbm [shape: f32[2,128], index: 11, kind: output, shape index: {}]
  %s12 = sld [smem:[#allocation0]]
  $region66: #{tpu_custom_call.1} parent=0
    _
  %s14 = ssub.s32 1, %s12
  %s15 = scalar_select 0, %s14, %s12
  $region1: #{tpu_custom_call.1} parent=0
    #allocation2 [shape = 'u8[65536]{0}', space=vmem, size = 0x10000, scoped, tag = 'input window, operand 5, single buffered']
    #allocation3 [shape = 's32[1]{0}', space=sflag, size = 0x4, scoped, tag = 'scoped memory for tpu_custom_call.1']
    #allocation4 [shape = 's32[1]{0}', space=sflag, size = 0x4, scoped, tag = 'scoped memory for tpu_custom_call.1']
    #allocation5 [shape = 'u8[65536]{0}', space=vmem, size = 0x10000, scoped, tag = 'input window, operand 7, single buffered']
    #allocation6 [shape = 's32[1]{0}', space=sflag, size = 0x4, scoped, tag = 'scoped memory for tpu_custom_call.1']
    #allocation7 [shape = 'u8[65536]{0}', space=vmem, size = 0x10000, scoped, tag = 'input window, operand 9, single buffered']
    #allocation8 [shape = 'u8[1024]{0}', space=vmem, size = 0x400, scoped, tag = 'output window, operand 0, single buffered']
    %16 = vsyncpa [#allocation3], 0
    %17 = vsyncpa [#allocation6], 0
    %18 = vsyncpa [#allocation4], 0
    // Predicated region
    $region2: #{tpu_custom_call.1} parent=1 // pred_check
      _
    $region3: #{tpu_custom_call.1} parent=1 // pred_check_branch
      %20 = sbr.rel (0) target = $region5
    $region4: #{tpu_custom_call.1} parent=1 // pred_region
      _
    $region5: #{tpu_custom_call.1} parent=1 // pred_fallthru
      _
    // Predicated region
    $region6: #{tpu_custom_call.1} parent=1 // pred_check
      _
    $region7: #{tpu_custom_call.1} parent=1 // pred_check_branch
      %22 = sbr.rel (0) target = $region9
    $region8: #{tpu_custom_call.1} parent=1 // pred_region
      _
    $region9: #{tpu_custom_call.1} parent=1 // pred_fallthru
      _
    // Predicated region
    $region10: #{tpu_custom_call.1} parent=1 // pred_check
      _
    $region11: #{tpu_custom_call.1} parent=1 // pred_check_branch
      %24 = sbr.rel (0) target = $region13
    $region12: #{tpu_custom_call.1} parent=1 // pred_region
      _
    $region13: #{tpu_custom_call.1} parent=1 // pred_fallthru
      _
    // Predicated region
    $region14: #{tpu_custom_call.1} parent=1 // pred_check
      _
    $region15: #{tpu_custom_call.1} parent=1 // pred_check_branch
      %26 = sbr.rel (0) target = $region17
    $region16: #{tpu_custom_call.1} parent=1 // pred_region
      _
    $region17: #{tpu_custom_call.1} parent=1 // pred_fallthru
      _
    // Predicated region
    $region18: #{tpu_custom_call.1} parent=1 // pred_check
      _
    $region19: #{tpu_custom_call.1} parent=1 // pred_check_branch
      %28 = sbr.rel (0) target = $region21
    $region20: #{tpu_custom_call.1} parent=1 // pred_region
      _
    $region21: #{tpu_custom_call.1} parent=1 // pred_fallthru
      _
    // Predicated region
    $region22: #{tpu_custom_call.1} parent=1 // pred_check
      _
    $region23: #{tpu_custom_call.1} parent=1 // pred_check_branch
      %30 = sbr.rel (0) target = $region25
    $region24: #{tpu_custom_call.1} parent=1 // pred_region
      %s32 = ssub.s32 2048, 2048
      %33 = vsyncadd [#allocation3], %s32
      %s34 = sshll.u32 [#allocation2], 4
      %s35 = int_to_ptr.vmem [resolvable:$true] %s34
      %40 = dma.hbm_to_vmem [thread:$0]  %s5, 2048, %s35, [#allocation3], 128, 128, 8
    $region25: #{tpu_custom_call.1} parent=1 // pred_fallthru
      _
    // Predicated region
    $region26: #{tpu_custom_call.1} parent=1 // pred_check
      _
    $region27: #{tpu_custom_call.1} parent=1 // pred_check_branch
      %42 = sbr.rel (0) target = $region29
    $region28: #{tpu_custom_call.1} parent=1 // pred_region
      _
    $region29: #{tpu_custom_call.1} parent=1 // pred_fallthru
      _
    // Predicated region
    $region30: #{tpu_custom_call.1} parent=1 // pred_check
      _
    $region31: #{tpu_custom_call.1} parent=1 // pred_check_branch
      %44 = sbr.rel (0) target = $region33
    $region32: #{tpu_custom_call.1} parent=1 // pred_region
      %s46 = ssub.s32 2048, 2048
      %47 = vsyncadd [#allocation6], %s46
      %s48 = sshll.u32 [#allocation5], 4
      %s49 = int_to_ptr.vmem [resolvable:$true] %s48
      %54 = dma.hbm_to_vmem [thread:$0]  %s7, 2048, %s49, [#allocation6], 128, 128, 8
    $region33: #{tpu_custom_call.1} parent=1 // pred_fallthru
      _
    // Predicated region
    $region34: #{tpu_custom_call.1} parent=1 // pred_check
      _
    $region35: #{tpu_custom_call.1} parent=1 // pred_check_branch
      %56 = sbr.rel (0) target = $region37
    $region36: #{tpu_custom_call.1} parent=1 // pred_region
      _
    $region37: #{tpu_custom_call.1} parent=1 // pred_fallthru
      _
    // Predicated region
    $region38: #{tpu_custom_call.1} parent=1 // pred_check
      _
    $region39: #{tpu_custom_call.1} parent=1 // pred_check_branch
      %58 = sbr.rel (0) target = $region41
    $region40: #{tpu_custom_call.1} parent=1 // pred_region
      %s60 = ssub.s32 2048, 2048
      %61 = vsyncadd [#allocation6], %s60
      %s62 = sshll.u32 [#allocation7], 4
      %s63 = int_to_ptr.vmem [resolvable:$true] %s62
      %68 = dma.hbm_to_vmem [thread:$0]  %s9, 2048, %s63, [#allocation6], 128, 128, 8
    $region41: #{tpu_custom_call.1} parent=1 // pred_fallthru
      _
    // Predicated region
    $region42: #{tpu_custom_call.1} parent=1 // pred_check
      _
    $region43: #{tpu_custom_call.1} parent=1 // pred_check_branch
      %70 = sbr.rel (0) target = $region45
    $region44: #{tpu_custom_call.1} parent=1 // pred_region
      _
    $region45: #{tpu_custom_call.1} parent=1 // pred_fallthru
      _
    // Predicated region
    $region46: #{tpu_custom_call.1} parent=1 // pred_check
      _
    $region47: #{tpu_custom_call.1} parent=1 // pred_check_branch
      %72 = sbr.rel (0) target = $region49
    $region48: #{tpu_custom_call.1} parent=1 // pred_region
      %73 = dma.done [#allocation3], 2048
    $region49: #{tpu_custom_call.1} parent=1 // pred_fallthru
      _
    // Predicated region
    $region50: #{tpu_custom_call.1} parent=1 // pred_check
      _
    $region51: #{tpu_custom_call.1} parent=1 // pred_check_branch
      %75 = sbr.rel (0) target = $region53
    $region52: #{tpu_custom_call.1} parent=1 // pred_region
      %76 = dma.done [#allocation6], 2048
    $region53: #{tpu_custom_call.1} parent=1 // pred_fallthru
      _
    // Predicated region
    $region54: #{tpu_custom_call.1} parent=1 // pred_check
      _
    $region55: #{tpu_custom_call.1} parent=1 // pred_check_branch
      %78 = sbr.rel (0) target = $region57
    $region56: #{tpu_custom_call.1} parent=1 // pred_region
      %79 = dma.done [#allocation6], 2048
    $region57: #{tpu_custom_call.1} parent=1 // pred_fallthru
      _
    %v80 = vld [vmem:[%s0] sm:$0xff]
    %v81 = vld [vmem:[%s0 + $0x8] sm:$0xff]
    %v82 = vld [vmem:[%s1] sm:$0xff]
    %v83 = vld [vmem:[%s1 + $0x8] sm:$0xff]
    %vm84 = vcmask 130048
    %v86 = vsel %vm84, %v80, 0
    %v89 = vsel %vm84, %v81, 0
    %91 = vmatprep.subr.mxu0 0.0
    %92 = vmatpush1.msra.mxu0 0.0
    %93 = vmatprep.subr.mxu0 0.0
    %94 = vmatpush1.msra.mxu0 0.0
    %95 = vmatprep.subr.mxu0 0.0
    %96 = vmatpush1.msra.mxu0 0.0
    %97 = vmatprep.subr.mxu0 0.0
    %98 = vmatpush1.msra.mxu0 0.0
    %99 = vmatprep.subr.mxu0 0.0
    %100 = vmatpush1.msra.mxu0 0.0
    %101 = vmatprep.subr.mxu0 0.0
    %102 = vmatpush1.msra.mxu0 0.0
    %103 = vmatprep.subr.mxu0 0.0
    %104 = vmatpush1.msra.mxu0 0.0
    %105 = vmatprep.subr.mxu0 0.0
    %106 = vmatpush1.msra.mxu0 0.0
    %107 = vmatprep.subr.mxu0 0.0
    %108 = vmatpush1.msra.mxu0 0.0
    %109 = vmatprep.subr.mxu0 0.0
    %110 = vmatpush1.msra.mxu0 0.0
    %111 = vmatprep.subr.mxu0 0.0
    %112 = vmatpush1.msra.mxu0 0.0
    %113 = vmatprep.subr.mxu0 0.0
    %114 = vmatpush1.msra.mxu0 0.0
    %115 = vmatprep.subr.mxu0 0.0
    %116 = vmatpush1.msra.mxu0 0.0
    %117 = vmatprep.subr.mxu0 0.0
    %118 = vmatpush1.msra.mxu0 0.0
    %119 = vmatprep.subr.mxu0 0.0
    %120 = vmatpush1.msra.mxu0 %v83
    %121 = vmatprep.subr.mxu0 0.0
    %122 = vmatpush1.msra.mxu0 %v82
    %123 = vmatprep.subr.mxu0 0.0
    %124 = vmatpush2.msra.mxu0 0.0
    %125 = vmatprep.subr.mxu0 0.0
    %126 = vmatpush2.msra.mxu0 0.0
    %127 = vmatprep.subr.mxu0 0.0
    %128 = vmatpush2.msra.mxu0 0.0
    %129 = vmatprep.subr.mxu0 0.0
    %130 = vmatpush2.msra.mxu0 0.0
    %131 = vmatprep.subr.mxu0 0.0
    %132 = vmatpush2.msra.mxu0 0.0
    %133 = vmatprep.subr.mxu0 0.0
    %134 = vmatpush2.msra.mxu0 0.0
    %135 = vmatprep.subr.mxu0 0.0
    %136 = vmatpush2.msra.mxu0 0.0
    %137 = vmatprep.subr.mxu0 0.0
    %138 = vmatpush2.msra.mxu0 0.0
    %139 = vmatprep.subr.mxu0 0.0
    %140 = vmatpush2.msra.mxu0 0.0
    %141 = vmatprep.subr.mxu0 0.0
    %142 = vmatpush2.msra.mxu0 0.0
    %143 = vmatprep.subr.mxu0 0.0
    %144 = vmatpush2.msra.mxu0 0.0
    %145 = vmatprep.subr.mxu0 0.0
    %146 = vmatpush2.msra.mxu0 0.0
    %147 = vmatprep.subr.mxu0 0.0
    %148 = vmatpush2.msra.mxu0 0.0
    %149 = vmatprep.subr.mxu0 0.0
    %150 = vmatpush2.msra.mxu0 0.0
    %151 = vmatprep.subr.mxu0 0.0
    %152 = vmatpush2.msra.mxu0 0.0
    %153 = vmatprep.subr.mxu0 0.0
    %154 = vmatpush2.msra.mxu0 0.0
    %155 = vmatprep.mubr.f32.mxu0 0.0
    %156 = vmatmul.mubr.f32.gmra.mxu0 %v86
    %v157 = vpop.f32.mrf.mxu0
    %v158 = vadd.f32 0.0, %v157
    %v159 = vpop.f32.mrf.mxu0
    %160 = vmatprep.mubr.f32.mxu0 0.0
    %161 = vmatmul.mubr.f32.gmra.mxu0 %v89
    %v162 = vpop.f32.mrf.mxu0
    %v163 = vadd.f32 0.0, %v162
    %v164 = vpop.f32.mrf.mxu0
    %165 = vdwg.mxu0
    %v166 = vld [vmem:[%s3] sm:$0xf]
    %v167 = vld [vmem:[%s4] sm:$0x1]
    %v169 = vlaneseq
    %v170 = vshrl.u32 %v169, 7
    %v171 = vsub.s32 0, %v170
    %v172 = vrot.slane %v167, %v171
    %vm174 = vcmask 31744
    %v176 = vsel %vm174, %v158, 0
    %v179 = vsel %vm174, %v163, 0
    %vm181 = vcmask 1043456
    %v183 = vsel %vm181, %v166, 0
    %185 = vmatprep.subr.mxu0 0.0
    %186 = vmatpush1.msra.mxu0 0.0
    %187 = vmatprep.subr.mxu0 0.0
    %188 = vmatpush1.msra.mxu0 0.0
    %189 = vmatprep.subr.mxu0 0.0
    %190 = vmatpush1.msra.mxu0 0.0
    %191 = vmatprep.subr.mxu0 0.0
    %192 = vmatpush1.msra.mxu0 0.0
    %193 = vmatprep.subr.mxu0 0.0
    %194 = vmatpush1.msra.mxu0 0.0
    %195 = vmatprep.subr.mxu0 0.0
    %196 = vmatpush1.msra.mxu0 0.0
    %197 = vmatprep.subr.mxu0 0.0
    %198 = vmatpush1.msra.mxu0 0.0
    %199 = vmatprep.subr.mxu0 0.0
    %200 = vmatpush1.msra.mxu0 0.0
    %201 = vmatprep.subr.mxu0 0.0
    %202 = vmatpush1.msra.mxu0 0.0
    %203 = vmatprep.subr.mxu0 0.0
    %204 = vmatpush1.msra.mxu0 0.0
    %205 = vmatprep.subr.mxu0 0.0
    %206 = vmatpush1.msra.mxu0 0.0
    %207 = vmatprep.subr.mxu0 0.0
    %208 = vmatpush1.msra.mxu0 0.0
    %209 = vmatprep.subr.mxu0 0.0
    %210 = vmatpush1.msra.mxu0 0.0
    %211 = vmatprep.subr.mxu0 0.0
    %212 = vmatpush1.msra.mxu0 0.0
    %213 = vmatprep.subr.mxu0 0.0
    %214 = vmatpush1.msra.mxu0 0.0
    %215 = vmatprep.subr.mxu0 0.0
    %216 = vmatpush1.msra.mxu0 %v183
    %217 = vmatprep.subr.mxu0 0.0
    %218 = vmatpush2.msra.mxu0 0.0
    %219 = vmatprep.subr.mxu0 0.0
    %220 = vmatpush2.msra.mxu0 0.0
    %221 = vmatprep.subr.mxu0 0.0
    %222 = vmatpush2.msra.mxu0 0.0
    %223 = vmatprep.subr.mxu0 0.0
    %224 = vmatpush2.msra.mxu0 0.0
    %225 = vmatprep.subr.mxu0 0.0
    %226 = vmatpush2.msra.mxu0 0.0
    %227 = vmatprep.subr.mxu0 0.0
    %228 = vmatpush2.msra.mxu0 0.0
    %229 = vmatprep.subr.mxu0 0.0
    %230 = vmatpush2.msra.mxu0 0.0
    %231 = vmatprep.subr.mxu0 0.0
    %232 = vmatpush2.msra.mxu0 0.0
    %233 = vmatprep.subr.mxu0 0.0
    %234 = vmatpush2.msra.mxu0 0.0
    %235 = vmatprep.subr.mxu0 0.0
    %236 = vmatpush2.msra.mxu0 0.0
    %237 = vmatprep.subr.mxu0 0.0
    %238 = vmatpush2.msra.mxu0 0.0
    %239 = vmatprep.subr.mxu0 0.0
    %240 = vmatpush2.msra.mxu0 0.0
    %241 = vmatprep.subr.mxu0 0.0
    %242 = vmatpush2.msra.mxu0 0.0
    %243 = vmatprep.subr.mxu0 0.0
    %244 = vmatpush2.msra.mxu0 0.0
    %245 = vmatprep.subr.mxu0 0.0
    %246 = vmatpush2.msra.mxu0 0.0
    %247 = vmatprep.subr.mxu0 0.0
    %248 = vmatpush2.msra.mxu0 0.0
    %249 = vmatprep.mubr.f32.mxu0 0.0
    %250 = vmatmul.mubr.f32.gmra.mxu0 %v176
    %v251 = vpop.f32.mrf.mxu0
    %v252 = vadd.f32 %v172, %v251
    %v253 = vpop.f32.mrf.mxu0
    %254 = vmatprep.mubr.f32.mxu0 0.0
    %255 = vmatmul.mubr.f32.gmra.mxu0 %v179
    %v256 = vpop.f32.mrf.mxu0
    %v257 = vadd.f32 %v172, %v256
    %v258 = vpop.f32.mrf.mxu0
    %259 = vdwg.mxu0
    %v260 = vmax.f32 %v252, 0.0
    %v261 = vmax.f32 %v257, 0.0
    %v262 = vld [vmem:[#allocation2] sm:$0xff]
    %v263 = vld [vmem:[#allocation2 + $0x8] sm:$0xff]
    %v264 = vld [vmem:[#allocation2 + $0x10] sm:$0xff]
    %v265 = vld [vmem:[#allocation2 + $0x18] sm:$0xff]
    %v266 = vld [vmem:[#allocation2 + $0x20] sm:$0xff]
    %v267 = vld [vmem:[#allocation2 + $0x28] sm:$0xff]
    %v268 = vld [vmem:[#allocation2 + $0x30] sm:$0xff]
    %v269 = vld [vmem:[#allocation2 + $0x38] sm:$0xff]
    %v270 = vld [vmem:[#allocation2 + $0x40] sm:$0xff]
    %v271 = vld [vmem:[#allocation2 + $0x48] sm:$0xff]
    %v272 = vld [vmem:[#allocation2 + $0x50] sm:$0xff]
    %v273 = vld [vmem:[#allocation2 + $0x58] sm:$0xff]
    %v274 = vld [vmem:[#allocation2 + $0x60] sm:$0xff]
    %v275 = vld [vmem:[#allocation2 + $0x68] sm:$0xff]
    %v276 = vld [vmem:[#allocation2 + $0x70] sm:$0xff]
    %v277 = vld [vmem:[#allocation2 + $0x78] sm:$0xff]
    %278 = vmatprep.subr.mxu0 0.0
    %279 = vmatpush1.msra.mxu0 %v277
    %280 = vmatprep.subr.mxu0 0.0
    %281 = vmatpush1.msra.mxu0 %v276
    %282 = vmatprep.subr.mxu0 0.0
    %283 = vmatpush1.msra.mxu0 %v275
    %284 = vmatprep.subr.mxu0 0.0
    %285 = vmatpush1.msra.mxu0 %v274
    %286 = vmatprep.subr.mxu0 0.0
    %287 = vmatpush1.msra.mxu0 %v273
    %288 = vmatprep.subr.mxu0 0.0
    %289 = vmatpush1.msra.mxu0 %v272
    %290 = vmatprep.subr.mxu0 0.0
    %291 = vmatpush1.msra.mxu0 %v271
    %292 = vmatprep.subr.mxu0 0.0
    %293 = vmatpush1.msra.mxu0 %v270
    %294 = vmatprep.subr.mxu0 0.0
    %295 = vmatpush1.msra.mxu0 %v269
    %296 = vmatprep.subr.mxu0 0.0
    %297 = vmatpush1.msra.mxu0 %v268
    %298 = vmatprep.subr.mxu0 0.0
    %299 = vmatpush1.msra.mxu0 %v267
    %300 = vmatprep.subr.mxu0 0.0
    %301 = vmatpush1.msra.mxu0 %v266
    %302 = vmatprep.subr.mxu0 0.0
    %303 = vmatpush1.msra.mxu0 %v265
    %304 = vmatprep.subr.mxu0 0.0
    %305 = vmatpush1.msra.mxu0 %v264
    %306 = vmatprep.subr.mxu0 0.0
    %307 = vmatpush1.msra.mxu0 %v263
    %308 = vmatprep.subr.mxu0 0.0
    %309 = vmatpush1.msra.mxu0 %v262
    %310 = vmatprep.subr.mxu0 0.0
    %311 = vmatpush2.msra.mxu0 0.0
    %312 = vmatprep.subr.mxu0 0.0
    %313 = vmatpush2.msra.mxu0 0.0
    %314 = vmatprep.subr.mxu0 0.0
    %315 = vmatpush2.msra.mxu0 0.0
    %316 = vmatprep.subr.mxu0 0.0
    %317 = vmatpush2.msra.mxu0 0.0
    %318 = vmatprep.subr.mxu0 0.0
    %319 = vmatpush2.msra.mxu0 0.0
    %320 = vmatprep.subr.mxu0 0.0
    %321 = vmatpush2.msra.mxu0 0.0
    %322 = vmatprep.subr.mxu0 0.0
    %323 = vmatpush2.msra.mxu0 0.0
    %324 = vmatprep.subr.mxu0 0.0
    %325 = vmatpush2.msra.mxu0 0.0
    %326 = vmatprep.subr.mxu0 0.0
    %327 = vmatpush2.msra.mxu0 0.0
    %328 = vmatprep.subr.mxu0 0.0
    %329 = vmatpush2.msra.mxu0 0.0
    %330 = vmatprep.subr.mxu0 0.0
    %331 = vmatpush2.msra.mxu0 0.0
    %332 = vmatprep.subr.mxu0 0.0
    %333 = vmatpush2.msra.mxu0 0.0
    %334 = vmatprep.subr.mxu0 0.0
    %335 = vmatpush2.msra.mxu0 0.0
    %336 = vmatprep.subr.mxu0 0.0
    %337 = vmatpush2.msra.mxu0 0.0
    %338 = vmatprep.subr.mxu0 0.0
    %339 = vmatpush2.msra.mxu0 0.0
    %340 = vmatprep.subr.mxu0 0.0
    %341 = vmatpush2.msra.mxu0 0.0
    %342 = vmatprep.mubr.f32.mxu0 0.0
    %343 = vmatmul.mubr.f32.gmra.mxu0 %v260
    %v344 = vpop.f32.mrf.mxu0
    %v345 = vadd.f32 0.0, %v344
    %v346 = vpop.f32.mrf.mxu0
    %347 = vmatprep.mubr.f32.mxu0 0.0
    %348 = vmatmul.mubr.f32.gmra.mxu0 %v261
    %v349 = vpop.f32.mrf.mxu0
    %v350 = vadd.f32 0.0, %v349
    %v351 = vpop.f32.mrf.mxu0
    %352 = vdwg.mxu0
    %v353 = vld [vmem:[%s6] sm:$0x1]
    %v355 = vlaneseq
    %v356 = vshrl.u32 %v355, 7
    %v357 = vsub.s32 0, %v356
    %v358 = vrot.slane %v353, %v357
    %360 = vmatprep.subr.mxu0 0.0
    %361 = vmatpush1.msra.mxu0 0.0
    %362 = vmatprep.subr.mxu0 0.0
    %363 = vmatpush1.msra.mxu0 0.0
    %364 = vmatprep.subr.mxu0 0.0
    %365 = vmatpush1.msra.mxu0 0.0
    %366 = vmatprep.subr.mxu0 0.0
    %367 = vmatpush1.msra.mxu0 0.0
    %368 = vmatprep.subr.mxu0 0.0
    %369 = vmatpush1.msra.mxu0 0.0
    %370 = vmatprep.subr.mxu0 0.0
    %371 = vmatpush1.msra.mxu0 0.0
    %372 = vmatprep.subr.mxu0 0.0
    %373 = vmatpush1.msra.mxu0 0.0
    %374 = vmatprep.subr.mxu0 0.0
    %375 = vmatpush1.msra.mxu0 0.0
    %376 = vmatprep.subr.mxu0 0.0
    %377 = vmatpush1.msra.mxu0 0.0
    %378 = vmatprep.subr.mxu0 0.0
    %379 = vmatpush1.msra.mxu0 0.0
    %380 = vmatprep.subr.mxu0 0.0
    %381 = vmatpush1.msra.mxu0 0.0
    %382 = vmatprep.subr.mxu0 0.0
    %383 = vmatpush1.msra.mxu0 0.0
    %384 = vmatprep.subr.mxu0 0.0
    %385 = vmatpush1.msra.mxu0 0.0
    %386 = vmatprep.subr.mxu0 0.0
    %387 = vmatpush1.msra.mxu0 0.0
    %388 = vmatprep.subr.mxu0 0.0
    %389 = vmatpush1.msra.mxu0 %v350
    %390 = vmatprep.subr.mxu0 0.0
    %391 = vmatpush1.msra.mxu0 %v345
    %392 = vmatprep.subr.mxu0 0.0
    %393 = vmatpush2.msra.mxu0 0.0
    %394 = vmatprep.subr.mxu0 0.0
    %395 = vmatpush2.msra.mxu0 0.0
    %396 = vmatprep.subr.mxu0 0.0
    %397 = vmatpush2.msra.mxu0 0.0
    %398 = vmatprep.subr.mxu0 0.0
    %399 = vmatpush2.msra.mxu0 0.0
    %400 = vmatprep.subr.mxu0 0.0
    %401 = vmatpush2.msra.mxu0 0.0
    %402 = vmatprep.subr.mxu0 0.0
    %403 = vmatpush2.msra.mxu0 0.0
    %404 = vmatprep.subr.mxu0 0.0
    %405 = vmatpush2.msra.mxu0 0.0
    %406 = vmatprep.subr.mxu0 0.0
    %407 = vmatpush2.msra.mxu0 0.0
    %408 = vmatprep.subr.mxu0 0.0
    %409 = vmatpush2.msra.mxu0 0.0
    %410 = vmatprep.subr.mxu0 0.0
    %411 = vmatpush2.msra.mxu0 0.0
    %412 = vmatprep.subr.mxu0 0.0
    %413 = vmatpush2.msra.mxu0 0.0
    %414 = vmatprep.subr.mxu0 0.0
    %415 = vmatpush2.msra.mxu0 0.0
    %416 = vmatprep.subr.mxu0 0.0
    %417 = vmatpush2.msra.mxu0 0.0
    %418 = vmatprep.subr.mxu0 0.0
    %419 = vmatpush2.msra.mxu0 0.0
    %420 = vmatprep.subr.mxu0 0.0
    %421 = vmatpush2.msra.mxu0 0.0
    %422 = vmatprep.subr.mxu0 0.0
    %423 = vmatpush2.msra.mxu0 0.0
    %424 = vmatprep.mubr.f32.mxu0 0.0
    %425 = vmatmul.mubr.f32.gmra.mxu0 %v86
    %v426 = vpop.f32.mrf.mxu0
    %v427 = vadd.f32 %v358, %v426
    %v428 = vpop.f32.mrf.mxu0
    %429 = vmatprep.mubr.f32.mxu0 0.0
    %430 = vmatmul.mubr.f32.gmra.mxu0 %v89
    %v431 = vpop.f32.mrf.mxu0
    %v432 = vadd.f32 %v358, %v431
    %v433 = vpop.f32.mrf.mxu0
    %434 = vdwg.mxu0
    %v435 = vmax.f32 %v427, 0.0
    %v436 = vmax.f32 %v432, 0.0
    %v437 = vld [vmem:[#allocation5] sm:$0xff]
    %v438 = vld [vmem:[#allocation5 + $0x8] sm:$0xff]
    %v439 = vld [vmem:[#allocation5 + $0x10] sm:$0xff]
    %v440 = vld [vmem:[#allocation5 + $0x18] sm:$0xff]
    %v441 = vld [vmem:[#allocation5 + $0x20] sm:$0xff]
    %v442 = vld [vmem:[#allocation5 + $0x28] sm:$0xff]
    %v443 = vld [vmem:[#allocation5 + $0x30] sm:$0xff]
    %v444 = vld [vmem:[#allocation5 + $0x38] sm:$0xff]
    %v445 = vld [vmem:[#allocation5 + $0x40] sm:$0xff]
    %v446 = vld [vmem:[#allocation5 + $0x48] sm:$0xff]
    %v447 = vld [vmem:[#allocation5 + $0x50] sm:$0xff]
    %v448 = vld [vmem:[#allocation5 + $0x58] sm:$0xff]
    %v449 = vld [vmem:[#allocation5 + $0x60] sm:$0xff]
    %v450 = vld [vmem:[#allocation5 + $0x68] sm:$0xff]
    %v451 = vld [vmem:[#allocation5 + $0x70] sm:$0xff]
    %v452 = vld [vmem:[#allocation5 + $0x78] sm:$0xff]
    %453 = vmatprep.subr.mxu0 0.0
    %454 = vmatpush1.msra.mxu0 %v452
    %455 = vmatprep.subr.mxu0 0.0
    %456 = vmatpush1.msra.mxu0 %v451
    %457 = vmatprep.subr.mxu0 0.0
    %458 = vmatpush1.msra.mxu0 %v450
    %459 = vmatprep.subr.mxu0 0.0
    %460 = vmatpush1.msra.mxu0 %v449
    %461 = vmatprep.subr.mxu0 0.0
    %462 = vmatpush1.msra.mxu0 %v448
    %463 = vmatprep.subr.mxu0 0.0
    %464 = vmatpush1.msra.mxu0 %v447
    %465 = vmatprep.subr.mxu0 0.0
    %466 = vmatpush1.msra.mxu0 %v446
    %467 = vmatprep.subr.mxu0 0.0
    %468 = vmatpush1.msra.mxu0 %v445
    %469 = vmatprep.subr.mxu0 0.0
    %470 = vmatpush1.msra.mxu0 %v444
    %471 = vmatprep.subr.mxu0 0.0
    %472 = vmatpush1.msra.mxu0 %v443
    %473 = vmatprep.subr.mxu0 0.0
    %474 = vmatpush1.msra.mxu0 %v442
    %475 = vmatprep.subr.mxu0 0.0
    %476 = vmatpush1.msra.mxu0 %v441
    %477 = vmatprep.subr.mxu0 0.0
    %478 = vmatpush1.msra.mxu0 %v440
    %479 = vmatprep.subr.mxu0 0.0
    %480 = vmatpush1.msra.mxu0 %v439
    %481 = vmatprep.subr.mxu0 0.0
    %482 = vmatpush1.msra.mxu0 %v438
    %483 = vmatprep.subr.mxu0 0.0
    %484 = vmatpush1.msra.mxu0 %v437
    %485 = vmatprep.subr.mxu0 0.0
    %486 = vmatpush2.msra.mxu0 0.0
    %487 = vmatprep.subr.mxu0 0.0
    %488 = vmatpush2.msra.mxu0 0.0
    %489 = vmatprep.subr.mxu0 0.0
    %490 = vmatpush2.msra.mxu0 0.0
    %491 = vmatprep.subr.mxu0 0.0
    %492 = vmatpush2.msra.mxu0 0.0
    %493 = vmatprep.subr.mxu0 0.0
    %494 = vmatpush2.msra.mxu0 0.0
    %495 = vmatprep.subr.mxu0 0.0
    %496 = vmatpush2.msra.mxu0 0.0
    %497 = vmatprep.subr.mxu0 0.0
    %498 = vmatpush2.msra.mxu0 0.0
    %499 = vmatprep.subr.mxu0 0.0
    %500 = vmatpush2.msra.mxu0 0.0
    %501 = vmatprep.subr.mxu0 0.0
    %502 = vmatpush2.msra.mxu0 0.0
    %503 = vmatprep.subr.mxu0 0.0
    %504 = vmatpush2.msra.mxu0 0.0
    %505 = vmatprep.subr.mxu0 0.0
    %506 = vmatpush2.msra.mxu0 0.0
    %507 = vmatprep.subr.mxu0 0.0
    %508 = vmatpush2.msra.mxu0 0.0
    %509 = vmatprep.subr.mxu0 0.0
    %510 = vmatpush2.msra.mxu0 0.0
    %511 = vmatprep.subr.mxu0 0.0
    %512 = vmatpush2.msra.mxu0 0.0
    %513 = vmatprep.subr.mxu0 0.0
    %514 = vmatpush2.msra.mxu0 0.0
    %515 = vmatprep.subr.mxu0 0.0
    %516 = vmatpush2.msra.mxu0 0.0
    %517 = vmatprep.mubr.f32.mxu0 0.0
    %518 = vmatmul.mubr.f32.gmra.mxu0 %v435
    %v519 = vpop.f32.mrf.mxu0
    %v520 = vadd.f32 0.0, %v519
    %v521 = vpop.f32.mrf.mxu0
    %522 = vmatprep.mubr.f32.mxu0 0.0
    %523 = vmatmul.mubr.f32.gmra.mxu0 %v436
    %v524 = vpop.f32.mrf.mxu0
    %v525 = vadd.f32 0.0, %v524
    %v526 = vpop.f32.mrf.mxu0
    %527 = vdwg.mxu0
    %v528 = vld [vmem:[%s8] sm:$0x1]
    %v530 = vlaneseq
    %v531 = vshrl.u32 %v530, 7
    %v532 = vsub.s32 0, %v531
    %v533 = vrot.slane %v528, %v532
    %535 = vmatprep.subr.mxu0 0.0
    %536 = vmatpush1.msra.mxu0 0.0
    %537 = vmatprep.subr.mxu0 0.0
    %538 = vmatpush1.msra.mxu0 0.0
    %539 = vmatprep.subr.mxu0 0.0
    %540 = vmatpush1.msra.mxu0 0.0
    %541 = vmatprep.subr.mxu0 0.0
    %542 = vmatpush1.msra.mxu0 0.0
    %543 = vmatprep.subr.mxu0 0.0
    %544 = vmatpush1.msra.mxu0 0.0
    %545 = vmatprep.subr.mxu0 0.0
    %546 = vmatpush1.msra.mxu0 0.0
    %547 = vmatprep.subr.mxu0 0.0
    %548 = vmatpush1.msra.mxu0 0.0
    %549 = vmatprep.subr.mxu0 0.0
    %550 = vmatpush1.msra.mxu0 0.0
    %551 = vmatprep.subr.mxu0 0.0
    %552 = vmatpush1.msra.mxu0 0.0
    %553 = vmatprep.subr.mxu0 0.0
    %554 = vmatpush1.msra.mxu0 0.0
    %555 = vmatprep.subr.mxu0 0.0
    %556 = vmatpush1.msra.mxu0 0.0
    %557 = vmatprep.subr.mxu0 0.0
    %558 = vmatpush1.msra.mxu0 0.0
    %559 = vmatprep.subr.mxu0 0.0
    %560 = vmatpush1.msra.mxu0 0.0
    %561 = vmatprep.subr.mxu0 0.0
    %562 = vmatpush1.msra.mxu0 0.0
    %563 = vmatprep.subr.mxu0 0.0
    %564 = vmatpush1.msra.mxu0 %v525
    %565 = vmatprep.subr.mxu0 0.0
    %566 = vmatpush1.msra.mxu0 %v520
    %567 = vmatprep.subr.mxu0 0.0
    %568 = vmatpush2.msra.mxu0 0.0
    %569 = vmatprep.subr.mxu0 0.0
    %570 = vmatpush2.msra.mxu0 0.0
    %571 = vmatprep.subr.mxu0 0.0
    %572 = vmatpush2.msra.mxu0 0.0
    %573 = vmatprep.subr.mxu0 0.0
    %574 = vmatpush2.msra.mxu0 0.0
    %575 = vmatprep.subr.mxu0 0.0
    %576 = vmatpush2.msra.mxu0 0.0
    %577 = vmatprep.subr.mxu0 0.0
    %578 = vmatpush2.msra.mxu0 0.0
    %579 = vmatprep.subr.mxu0 0.0
    %580 = vmatpush2.msra.mxu0 0.0
    %581 = vmatprep.subr.mxu0 0.0
    %582 = vmatpush2.msra.mxu0 0.0
    %583 = vmatprep.subr.mxu0 0.0
    %584 = vmatpush2.msra.mxu0 0.0
    %585 = vmatprep.subr.mxu0 0.0
    %586 = vmatpush2.msra.mxu0 0.0
    %587 = vmatprep.subr.mxu0 0.0
    %588 = vmatpush2.msra.mxu0 0.0
    %589 = vmatprep.subr.mxu0 0.0
    %590 = vmatpush2.msra.mxu0 0.0
    %591 = vmatprep.subr.mxu0 0.0
    %592 = vmatpush2.msra.mxu0 0.0
    %593 = vmatprep.subr.mxu0 0.0
    %594 = vmatpush2.msra.mxu0 0.0
    %595 = vmatprep.subr.mxu0 0.0
    %596 = vmatpush2.msra.mxu0 0.0
    %597 = vmatprep.subr.mxu0 0.0
    %598 = vmatpush2.msra.mxu0 0.0
    %599 = vmatprep.mubr.f32.mxu0 0.0
    %600 = vmatmul.mubr.f32.gmra.mxu0 %v86
    %v601 = vpop.f32.mrf.mxu0
    %v602 = vadd.f32 %v533, %v601
    %v603 = vpop.f32.mrf.mxu0
    %604 = vmatprep.mubr.f32.mxu0 0.0
    %605 = vmatmul.mubr.f32.gmra.mxu0 %v89
    %v606 = vpop.f32.mrf.mxu0
    %v607 = vadd.f32 %v533, %v606
    %v608 = vpop.f32.mrf.mxu0
    %609 = vdwg.mxu0
    %v610 = vld [vmem:[%s2] sm:$0x3]
    %v612 = vsel %vm84, %v610, 0
    %614 = vmatprep.subr.mxu0 0.0
    %615 = vmatpush1.msra.mxu0 0.0
    %616 = vmatprep.subr.mxu0 0.0
    %617 = vmatpush1.msra.mxu0 0.0
    %618 = vmatprep.subr.mxu0 0.0
    %619 = vmatpush1.msra.mxu0 0.0
    %620 = vmatprep.subr.mxu0 0.0
    %621 = vmatpush1.msra.mxu0 0.0
    %622 = vmatprep.subr.mxu0 0.0
    %623 = vmatpush1.msra.mxu0 0.0
    %624 = vmatprep.subr.mxu0 0.0
    %625 = vmatpush1.msra.mxu0 0.0
    %626 = vmatprep.subr.mxu0 0.0
    %627 = vmatpush1.msra.mxu0 0.0
    %628 = vmatprep.subr.mxu0 0.0
    %629 = vmatpush1.msra.mxu0 0.0
    %630 = vmatprep.subr.mxu0 0.0
    %631 = vmatpush1.msra.mxu0 0.0
    %632 = vmatprep.subr.mxu0 0.0
    %633 = vmatpush1.msra.mxu0 0.0
    %634 = vmatprep.subr.mxu0 0.0
    %635 = vmatpush1.msra.mxu0 0.0
    %636 = vmatprep.subr.mxu0 0.0
    %637 = vmatpush1.msra.mxu0 0.0
    %638 = vmatprep.subr.mxu0 0.0
    %639 = vmatpush1.msra.mxu0 0.0
    %640 = vmatprep.subr.mxu0 0.0
    %641 = vmatpush1.msra.mxu0 0.0
    %642 = vmatprep.subr.mxu0 0.0
    %643 = vmatpush1.msra.mxu0 %v607
    %644 = vmatprep.subr.mxu0 0.0
    %645 = vmatpush1.msra.mxu0 %v602
    %646 = vmatprep.subr.mxu0 0.0
    %647 = vmatpush2.msra.mxu0 0.0
    %648 = vmatprep.subr.mxu0 0.0
    %649 = vmatpush2.msra.mxu0 0.0
    %650 = vmatprep.subr.mxu0 0.0
    %651 = vmatpush2.msra.mxu0 0.0
    %652 = vmatprep.subr.mxu0 0.0
    %653 = vmatpush2.msra.mxu0 0.0
    %654 = vmatprep.subr.mxu0 0.0
    %655 = vmatpush2.msra.mxu0 0.0
    %656 = vmatprep.subr.mxu0 0.0
    %657 = vmatpush2.msra.mxu0 0.0
    %658 = vmatprep.subr.mxu0 0.0
    %659 = vmatpush2.msra.mxu0 0.0
    %660 = vmatprep.subr.mxu0 0.0
    %661 = vmatpush2.msra.mxu0 0.0
    %662 = vmatprep.subr.mxu0 0.0
    %663 = vmatpush2.msra.mxu0 0.0
    %664 = vmatprep.subr.mxu0 0.0
    %665 = vmatpush2.msra.mxu0 0.0
    %666 = vmatprep.subr.mxu0 0.0
    %667 = vmatpush2.msra.mxu0 0.0
    %668 = vmatprep.subr.mxu0 0.0
    %669 = vmatpush2.msra.mxu0 0.0
    %670 = vmatprep.subr.mxu0 0.0
    %671 = vmatpush2.msra.mxu0 0.0
    %672 = vmatprep.subr.mxu0 0.0
    %673 = vmatpush2.msra.mxu0 0.0
    %674 = vmatprep.subr.mxu0 0.0
    %675 = vmatpush2.msra.mxu0 0.0
    %676 = vmatprep.subr.mxu0 0.0
    %677 = vmatpush2.msra.mxu0 0.0
    %678 = vmatprep.mubr.f32.mxu0 0.0
    %679 = vmatmul.mubr.f32.gmra.mxu0 %v612
    %v680 = vpop.f32.mrf.mxu0
    %v681 = vadd.f32 0.0, %v680
    %v682 = vpop.f32.mrf.mxu0
    %683 = vdwg.mxu0
    %v684 = vld [vmem:[#allocation7] sm:$0xff]
    %v685 = vld [vmem:[#allocation7 + $0x8] sm:$0xff]
    %v686 = vld [vmem:[#allocation7 + $0x10] sm:$0xff]
    %v687 = vld [vmem:[#allocation7 + $0x18] sm:$0xff]
    %v688 = vld [vmem:[#allocation7 + $0x20] sm:$0xff]
    %v689 = vld [vmem:[#allocation7 + $0x28] sm:$0xff]
    %v690 = vld [vmem:[#allocation7 + $0x30] sm:$0xff]
    %v691 = vld [vmem:[#allocation7 + $0x38] sm:$0xff]
    %v692 = vld [vmem:[#allocation7 + $0x40] sm:$0xff]
    %v693 = vld [vmem:[#allocation7 + $0x48] sm:$0xff]
    %v694 = vld [vmem:[#allocation7 + $0x50] sm:$0xff]
    %v695 = vld [vmem:[#allocation7 + $0x58] sm:$0xff]
    %v696 = vld [vmem:[#allocation7 + $0x60] sm:$0xff]
    %v697 = vld [vmem:[#allocation7 + $0x68] sm:$0xff]
    %v698 = vld [vmem:[#allocation7 + $0x70] sm:$0xff]
    %v699 = vld [vmem:[#allocation7 + $0x78] sm:$0xff]
    %v700 = vld [vmem:[%s10] sm:$0x1]
    %v702 = vlaneseq
    %v703 = vshrl.u32 %v702, 7
    %v704 = vsub.s32 0, %v703
    %v705 = vrot.slane %v700, %v704
    %707 = vmatprep.subr.mxu0 0.0
    %708 = vmatpush1.msra.mxu0 %v699
    %709 = vmatprep.subr.mxu0 0.0
    %710 = vmatpush1.msra.mxu0 %v698
    %711 = vmatprep.subr.mxu0 0.0
    %712 = vmatpush1.msra.mxu0 %v697
    %713 = vmatprep.subr.mxu0 0.0
    %714 = vmatpush1.msra.mxu0 %v696
    %715 = vmatprep.subr.mxu0 0.0
    %716 = vmatpush1.msra.mxu0 %v695
    %717 = vmatprep.subr.mxu0 0.0
    %718 = vmatpush1.msra.mxu0 %v694
    %719 = vmatprep.subr.mxu0 0.0
    %720 = vmatpush1.msra.mxu0 %v693
    %721 = vmatprep.subr.mxu0 0.0
    %722 = vmatpush1.msra.mxu0 %v692
    %723 = vmatprep.subr.mxu0 0.0
    %724 = vmatpush1.msra.mxu0 %v691
    %725 = vmatprep.subr.mxu0 0.0
    %726 = vmatpush1.msra.mxu0 %v690
    %727 = vmatprep.subr.mxu0 0.0
    %728 = vmatpush1.msra.mxu0 %v689
    %729 = vmatprep.subr.mxu0 0.0
    %730 = vmatpush1.msra.mxu0 %v688
    %731 = vmatprep.subr.mxu0 0.0
    %732 = vmatpush1.msra.mxu0 %v687
    %733 = vmatprep.subr.mxu0 0.0
    %734 = vmatpush1.msra.mxu0 %v686
    %735 = vmatprep.subr.mxu0 0.0
    %736 = vmatpush1.msra.mxu0 %v685
    %737 = vmatprep.subr.mxu0 0.0
    %738 = vmatpush1.msra.mxu0 %v684
    %739 = vmatprep.subr.mxu0 0.0
    %740 = vmatpush2.msra.mxu0 0.0
    %741 = vmatprep.subr.mxu0 0.0
    %742 = vmatpush2.msra.mxu0 0.0
    %743 = vmatprep.subr.mxu0 0.0
    %744 = vmatpush2.msra.mxu0 0.0
    %745 = vmatprep.subr.mxu0 0.0
    %746 = vmatpush2.msra.mxu0 0.0
    %747 = vmatprep.subr.mxu0 0.0
    %748 = vmatpush2.msra.mxu0 0.0
    %749 = vmatprep.subr.mxu0 0.0
    %750 = vmatpush2.msra.mxu0 0.0
    %751 = vmatprep.subr.mxu0 0.0
    %752 = vmatpush2.msra.mxu0 0.0
    %753 = vmatprep.subr.mxu0 0.0
    %754 = vmatpush2.msra.mxu0 0.0
    %755 = vmatprep.subr.mxu0 0.0
    %756 = vmatpush2.msra.mxu0 0.0
    %757 = vmatprep.subr.mxu0 0.0
    %758 = vmatpush2.msra.mxu0 0.0
    %759 = vmatprep.subr.mxu0 0.0
    %760 = vmatpush2.msra.mxu0 0.0
    %761 = vmatprep.subr.mxu0 0.0
    %762 = vmatpush2.msra.mxu0 0.0
    %763 = vmatprep.subr.mxu0 0.0
    %764 = vmatpush2.msra.mxu0 0.0
    %765 = vmatprep.subr.mxu0 0.0
    %766 = vmatpush2.msra.mxu0 0.0
    %767 = vmatprep.subr.mxu0 0.0
    %768 = vmatpush2.msra.mxu0 0.0
    %769 = vmatprep.subr.mxu0 0.0
    %770 = vmatpush2.msra.mxu0 0.0
    %771 = vmatprep.mubr.f32.mxu0 0.0
    %772 = vmatmul.mubr.f32.gmra.mxu0 %v681
    %v773 = vpop.f32.mrf.mxu0
    %v774 = vadd.f32 %v705, %v773
    %v775 = vpop.f32.mrf.mxu0
    %776 = vdwg.mxu0
    %v777 = vlaneseq
    %v778 = vand.u32 %v777, 127
    %vm779 = vcmp.lt.s32.totalorder %v778, 8
    %v780 = vsel %vm779, %v774, -1e+30
    %vm781 = vcmask 1041408
    %v782 = vsel %vm781, %v780, -inf
    %783 = vmax.xlane.f32.xlu0 %v782
    %v784 = vpop.xlane.xlu0 %783
    %v785 = vsub.f32 %v780, %v784
    %v786 = vmul.f32 %v785, 1.442695
    %v787 = vpow.pop %v786
    %v788 = vsel %vm781, %v787, 0.0
    %789 = vadd.xlane.f32.xlu0 %v788
    %v790 = vpop.xlane.xlu0 %789
    %v791 = vrcp.pop %v790
    %v792 = vmul.f32 %v787, %v791
    %vm793 = vcmp.ge.f32.partialorder %v792, 0.5
    %v794 = vsel %vm793, 1, 0
    %v795 = vcvt.s32.f32 %v794
    %796 = vst [vmem:[#allocation8] sm:$0x3] %v795
    // Predicated region
    $region58: #{tpu_custom_call.1} parent=1 // pred_check
      _
    $region59: #{tpu_custom_call.1} parent=1 // pred_check_branch
      %798 = sbr.rel (0) target = $region61
    $region60: #{tpu_custom_call.1} parent=1 // pred_region
      %s800 = ssub.s32 32, 32
      %801 = vsyncadd [#allocation4], %s800
      %s803 = sshll.u32 [#allocation8], 4
      %s804 = int_to_ptr.vmem [resolvable:$true] %s803
      %806 = dma.vmem_to_hbm [thread:$0]  %s804, 32, %s11, [#allocation4]
    $region61: #{tpu_custom_call.1} parent=1 // pred_fallthru
      _
    // Predicated region
    $region62: #{tpu_custom_call.1} parent=1 // pred_check
      _
    $region63: #{tpu_custom_call.1} parent=1 // pred_check_branch
      %808 = sbr.rel (0) target = $region65
    $region64: #{tpu_custom_call.1} parent=1 // pred_region
      %809 = dma.done [#allocation4], 32
    $region65: #{tpu_custom_call.1} parent=1 // pred_fallthru
      _
    %810 = vsyncpa [#allocation3], 1
    %811 = vsyncpa [#allocation6], 1
    %812 = vsyncpa [#allocation4], 1

</llo_original>
